<compile_context>
chip_gen: v7x
topology: tpu7x:2x2x1
jax: 0.10.0
libtpu: 0.0.40
codegen_flags: <defaults>
</compile_context>

<pallas_src>
import functools

import jax
import jax.numpy as jnp
from jax.experimental import pallas as pl
from jax.experimental.pallas import tpu as pltpu


def _round_up(x, m):
    return ((x + m - 1) // m) * m


def _vmem_capacity_bytes():
    """Per-core VMEM capacity (generation-aware), with a conservative fallback."""
    try:
        return int(pltpu.get_tpu_info().vmem_capacity_bytes)
    except Exception:
        return 64 * 2 ** 20  # v7x-safe conservative default


# ---------------------------------------------------------------------------
# Kernel
# ---------------------------------------------------------------------------
def _make_mlp_kernel(num_layers):
    """Fused MLP kernel: num_layers Linear layers with ReLU between them."""

    def kernel(x_ref, *refs):
        o_ref = refs[-1]
        # bf16 operands, f32 accumulation on the MXU.
        h = x_ref[...].astype(jnp.bfloat16)
        for l in range(num_layers):
            w_ref = refs[2 * l]
            b_ref = refs[2 * l + 1]
            h = jnp.dot(h, w_ref[...], preferred_element_type=jnp.float32)
            h = h + b_ref[...]
            if l < num_layers - 1:
                h = jnp.maximum(h, 0.0).astype(jnp.bfloat16)  # single ReLU
        o_ref[...] = h.astype(o_ref.dtype)

    return kernel


# ---------------------------------------------------------------------------
# One-time parameter preparation (OUTSIDE the forward path)
# ---------------------------------------------------------------------------
def prepare_mlp_params(params, lane_multiple=128):
    """Pad hidden feature dims to lane multiples and cast weights to bf16 once.

    params: list of (W_t [in, out] f32, b [1, out] f32) per layer.
    lane_multiple: 128 always correct; 256 preferable on v6e/v7x for large dims.
    The final layer's output dim is left unpadded (narrow masked store is
    cheaper than writing padded zero columns to HBM).
    """
    num_layers = len(params)
    prepped = []
    for l, (w, b) in enumerate(params):
        din, dout = w.shape
        din_p = din if l == 0 else _round_up(din, lane_multiple)
        dout_p = dout if l == num_layers - 1 else _round_up(dout, lane_multiple)
        w_p = jnp.pad(w, ((0, din_p - din), (0, dout_p - dout))).astype(jnp.bfloat16)
        b_p = jnp.pad(b, ((0, 0), (0, dout_p - dout))).astype(jnp.float32)
        prepped.append((w_p, b_p))
    return prepped


# ---------------------------------------------------------------------------
# Forward
# ---------------------------------------------------------------------------
@functools.partial(
    jax.jit,
    static_argnames=("tm", "single_buffer_weights", "vmem_limit", "out_dtype"),
)
def _mlp_forward_impl(x, flat_params, *, tm, single_buffer_weights, vmem_limit,
                      out_dtype):
    batch, seq, in_dim = x.shape
    num_layers = len(flat_params) // 2
    out_dim = flat_params[-2].shape[1]
    m = batch * seq
    m_p = _round_up(m, tm)
    grid = (m_p // tm,)

    x2 = x.reshape(m, in_dim)
    if m_p != m:
        x2 = jnp.pad(x2, ((0, m_p - m), (0, 0)))

    # Weights / biases: full-array blocks, constant index map (DMA'd once,
    # resident across the row grid).  Single-buffered when supported.
    def const_spec(a):
        nd = a.ndim

        def idx(i):
            return (0,) * nd

        if single_buffer_weights:
            return pl.BlockSpec(a.shape, idx, pipeline_mode=pl.Buffered(1))
        return pl.BlockSpec(a.shape, idx)

    in_specs = [pl.BlockSpec((tm, in_dim), lambda i: (i, 0))]  # streamed x tiles
    for a in flat_params:
        in_specs.append(const_spec(a))

    # Advisory cost estimate for the XLA scheduler.
    flops = 0
    w_bytes = 0
    for l in range(num_layers):
        w = flat_params[2 * l]
        b = flat_params[2 * l + 1]
        flops += 2 * m_p * w.shape[0] * w.shape[1]
        w_bytes += w.size * w.dtype.itemsize + b.size * b.dtype.itemsize
    out_itemsize = jnp.dtype(out_dtype).itemsize
    cost = pl.CostEstimate(
        flops=flops,
        transcendentals=0,
        bytes_accessed=m_p * in_dim * x.dtype.itemsize + w_bytes
        + m_p * out_dim * out_itemsize,
    )

    out = pl.pallas_call(
        _make_mlp_kernel(num_layers),
        out_shape=jax.ShapeDtypeStruct((m_p, out_dim), out_dtype),
        grid_spec=pltpu.PrefetchScalarGridSpec(
            num_scalar_prefetch=0,
            grid=grid,
            in_specs=in_specs,
            out_specs=pl.BlockSpec((tm, out_dim), lambda i: (i, 0)),
        ),
        compiler_params=pltpu.CompilerParams(
            dimension_semantics=("parallel",),  # megacore-shardable row axis
            vmem_limit_bytes=vmem_limit,
        ),
        cost_estimate=cost,
    )(x2, *flat_params)

    y = out if m_p == m else out[:m]
    return y.reshape(batch, seq, out_dim)


def mlp_forward(x, prepped_params, block_rows=None, out_dtype=None):
    """x: [batch, seq, input_dim]; prepped_params from prepare_mlp_params()."""
    flat = []
    for w, b in prepped_params:
        flat += [w, b]
    flat = tuple(flat)

    batch, seq, in_dim = x.shape
    m = batch * seq
    out_dim = flat[-2].shape[1]
    hidden_widths = [w.shape[1] for w, _ in prepped_params[:-1]]
    hid_max = max(hidden_widths) if hidden_widths else out_dim
    w_bytes = sum(int(w.size) * w.dtype.itemsize + int(b.size) * b.dtype.itemsize
                  for w, b in prepped_params)
    out_dtype = x.dtype if out_dtype is None else jnp.dtype(out_dtype)
    out_itemsize = jnp.dtype(out_dtype).itemsize
    x_itemsize = x.dtype.itemsize
    vmem_cap = _vmem_capacity_bytes()

    def need(t, weight_bufs):
        return (2 * t * in_dim * x_itemsize        # double-buffered x tile
                + 2 * t * out_dim * out_itemsize   # double-buffered out tile
                + weight_bufs * w_bytes            # resident weights/biases
                + 4 * t * hid_max * 4)             # live f32 intermediates

    # ---- row tile selection (multiple of 16: bf16 sublane packing) ----------
    if block_rows is not None:
        tm = max(16, _round_up(int(block_rows), 16))
    else:
        cap = 1024 if vmem_cap > 96 * 2 ** 20 else 512   # bigger tiles on 128 MiB parts
        tm = min(cap, _round_up(m, 16))
        if tm >= m and m >= 32:
            # Split into >=2 grid steps so both v7x TensorCores get work.
            tm = _round_up((m + 1) // 2, 16)
        # Auto-shrink the tile if the VMEM estimate exceeds ~85% of capacity.
        while tm > 64 and need(tm, 1) > int(0.85 * vmem_cap):
            tm = max(64, _round_up(tm // 2, 16))

    def limit(weight_bufs):
        return int(min(max(3 * need(tm, weight_bufs) // 2, 32 * 2 ** 20),
                       int(0.9 * vmem_cap)))

    try:
        return _mlp_forward_impl(x, flat, tm=tm, single_buffer_weights=True,
                                 vmem_limit=limit(1), out_dtype=out_dtype)
    except Exception:
        # TODO(synk): drop fallback once pl.Buffered(1) is supported everywhere.
        return _mlp_forward_impl(x, flat, tm=tm, single_buffer_weights=False,
                                 vmem_limit=limit(2), out_dtype=out_dtype)


# ---------------------------------------------------------------------------
# Init & reference
# ---------------------------------------------------------------------------
def init_mlp_params(key, input_dim, hidden_dim, output_dim, num_layers):
    """nn.Linear-style init (uniform +/- 1/sqrt(fan_in)), weights as (in, out)."""
    dims_in = [input_dim] + [hidden_dim] * (num_layers - 1)
    dims_out = [hidden_dim] * (num_layers - 1) + [output_dim]
    params = []
    for n_in, n_out in zip(dims_in, dims_out):
        key, kw, kb = jax.random.split(key, 3)
        bound = 1.0 / jnp.sqrt(n_in)
        w_t = jax.random.uniform(kw, (n_in, n_out), jnp.float32, -bound, bound)
        b = jax.random.uniform(kb, (1, n_out), jnp.float32, -bound, bound)
        params.append((w_t, b))
    return params


def mlp_reference(x, params):
    """Pure-JAX reference with matching bf16-operand / f32-accumulate math.
    Note: bf16 matmul operands diverge slightly from a true f32 nn.Linear."""
    h = x
    for i, (w_t, b) in enumerate(params):
        h = jnp.dot(h.astype(jnp.bfloat16), w_t.astype(jnp.bfloat16),
                    preferred_element_type=jnp.float32) + b[0]
        if i < len(params) - 1:
            h = jnp.maximum(h, 0.0)
    return h


if __name__ == "__main__":
    # Small shapes consistent with the module: num_layers=3 MLP.
    input_dim, hidden_dim, output_dim, num_layers = 16, 32, 8, 3

    key = jax.random.PRNGKey(0)
    key, kx1, kx2 = jax.random.split(key, 3)
    params = init_mlp_params(key, input_dim, hidden_dim, output_dim, num_layers)
    prepped = prepare_mlp_params(params)        # pad + bf16 cast ONCE (hoisted)

    # Case 1: tiny batch (single grid step).
    x1 = jax.random.normal(kx1, (2, 8, input_dim), jnp.float32)
    y1 = jax.block_until_ready(mlp_forward(x1, prepped))
    assert y1.shape == (2, 8, output_dim)
    assert jnp.allclose(y1, mlp_reference(x1, params), atol=1e-2, rtol=1e-2), \
        "mismatch vs reference (case 1)"

    # Case 2: multi-step row grid with row padding (default tm split).
    x2 = jax.random.normal(kx2, (3, 20, input_dim), jnp.float32)
    y2 = jax.block_until_ready(mlp_forward(x2, prepped))
    assert y2.shape == (3, 20, output_dim)
    assert jnp.allclose(y2, mlp_reference(x2, params), atol=1e-2, rtol=1e-2), \
        "mismatch vs reference (case 2)"

    # Case 3: explicit small row tile -> deeper pipelined grid.
    y3 = jax.block_until_ready(mlp_forward(x2, prepped, block_rows=16))
    assert jnp.allclose(y3, mlp_reference(x2, params), atol=1e-2, rtol=1e-2), \
        "mismatch vs reference (case 3)"

    print("KERNEL_OK")
</pallas_src>

<mosaic_0001>
module attributes {stable_mosaic.version = 11 : i64} {
  func.func @kernel(%arg0: i32, %arg1: memref<16x16xf32, #tpu.memory_space<vmem>>, %arg2: memref<16x128xbf16, #tpu.memory_space<vmem>>, %arg3: memref<1x128xf32, #tpu.memory_space<vmem>>, %arg4: memref<128x128xbf16, #tpu.memory_space<vmem>>, %arg5: memref<1x128xf32, #tpu.memory_space<vmem>>, %arg6: memref<128x8xbf16, #tpu.memory_space<vmem>>, %arg7: memref<1x8xf32, #tpu.memory_space<vmem>>, %arg8: memref<16x8xf32, #tpu.memory_space<vmem>>) attributes {dimension_semantics = [#tpu.dimension_semantics<parallel>], iteration_bounds = array<i64: 1>, scalar_prefetch = 0 : i64, scratch_operands = 0 : i64, tpu.core_type = #tpu.core_type<tc>, window_params = [{transform_indices = @transform_0, window_bounds = array<i64: 16, 16>}, {pipeline_mode = #tpu.pipeline_mode<synchronous>, transform_indices = @transform_1, window_bounds = array<i64: 16, 128>}, {pipeline_mode = #tpu.pipeline_mode<synchronous>, transform_indices = @transform_2, window_bounds = array<i64: 1, 128>}, {pipeline_mode = #tpu.pipeline_mode<synchronous>, transform_indices = @transform_3, window_bounds = array<i64: 128, 128>}, {pipeline_mode = #tpu.pipeline_mode<synchronous>, transform_indices = @transform_4, window_bounds = array<i64: 1, 128>}, {pipeline_mode = #tpu.pipeline_mode<synchronous>, transform_indices = @transform_5, window_bounds = array<i64: 128, 8>}, {pipeline_mode = #tpu.pipeline_mode<synchronous>, transform_indices = @transform_6, window_bounds = array<i64: 1, 8>}, {transform_indices = @transform_7, window_bounds = array<i64: 16, 8>}]} {
    %c0 = arith.constant 0 : index
    %c0_0 = arith.constant 0 : index
    %0 = vector.load %arg1[%c0, %c0_0] : memref<16x16xf32, #tpu.memory_space<vmem>>, vector<16x16xf32>
    %1 = arith.truncf %0 : vector<16x16xf32> to vector<16x16xbf16>
    %c0_1 = arith.constant 0 : index
    %c0_2 = arith.constant 0 : index
    %2 = vector.load %arg2[%c0_1, %c0_2] : memref<16x128xbf16, #tpu.memory_space<vmem>>, vector<16x128xbf16>
    %cst = arith.constant dense<0.000000e+00> : vector<16x128xf32>
    %3 = tpu.matmul %1, %2, %cst {dimension_numbers = #tpu.dot_dimension_numbers<[1], [0], [0], [1], [0, 0, 1, 1], [], []>} : vector<16x16xbf16>, vector<16x128xbf16>, vector<16x128xf32> -> vector<16x128xf32>
    %c0_3 = arith.constant 0 : index
    %c0_4 = arith.constant 0 : index
    %4 = vector.load %arg3[%c0_3, %c0_4] : memref<1x128xf32, #tpu.memory_space<vmem>>, vector<1x128xf32>
    %5 = vector.broadcast %4 : vector<1x128xf32> to vector<16x128xf32>
    %6 = arith.addf %3, %5 : vector<16x128xf32>
    %cst_5 = arith.constant 0.000000e+00 : f32
    %7 = vector.broadcast %cst_5 : f32 to vector<16x128xf32>
    %8 = arith.maximumf %6, %7 : vector<16x128xf32>
    %9 = arith.truncf %8 : vector<16x128xf32> to vector<16x128xbf16>
    %c0_6 = arith.constant 0 : index
    %c0_7 = arith.constant 0 : index
    %10 = vector.load %arg4[%c0_6, %c0_7] : memref<128x128xbf16, #tpu.memory_space<vmem>>, vector<128x128xbf16>
    %cst_8 = arith.constant dense<0.000000e+00> : vector<16x128xf32>
    %11 = tpu.matmul %9, %10, %cst_8 {dimension_numbers = #tpu.dot_dimension_numbers<[1], [0], [0], [1], [0, 0, 1, 1], [], []>} : vector<16x128xbf16>, vector<128x128xbf16>, vector<16x128xf32> -> vector<16x128xf32>
    %c0_9 = arith.constant 0 : index
    %c0_10 = arith.constant 0 : index
    %12 = vector.load %arg5[%c0_9, %c0_10] : memref<1x128xf32, #tpu.memory_space<vmem>>, vector<1x128xf32>
    %13 = vector.broadcast %12 : vector<1x128xf32> to vector<16x128xf32>
    %14 = arith.addf %11, %13 : vector<16x128xf32>
    %cst_11 = arith.constant 0.000000e+00 : f32
    %15 = vector.broadcast %cst_11 : f32 to vector<16x128xf32>
    %16 = arith.maximumf %14, %15 : vector<16x128xf32>
    %17 = arith.truncf %16 : vector<16x128xf32> to vector<16x128xbf16>
    %c0_12 = arith.constant 0 : index
    %c0_13 = arith.constant 0 : index
    %18 = vector.load %arg6[%c0_12, %c0_13] : memref<128x8xbf16, #tpu.memory_space<vmem>>, vector<128x8xbf16>
    %cst_14 = arith.constant dense<0.000000e+00> : vector<16x8xf32>
    %19 = tpu.matmul %17, %18, %cst_14 {dimension_numbers = #tpu.dot_dimension_numbers<[1], [0], [0], [1], [0, 0, 1, 1], [], []>} : vector<16x128xbf16>, vector<128x8xbf16>, vector<16x8xf32> -> vector<16x8xf32>
    %c0_15 = arith.constant 0 : index
    %c0_16 = arith.constant 0 : index
    %20 = vector.load %arg7[%c0_15, %c0_16] : memref<1x8xf32, #tpu.memory_space<vmem>>, vector<1x8xf32>
    %21 = vector.broadcast %20 : vector<1x8xf32> to vector<16x8xf32>
    %22 = arith.addf %19, %21 : vector<16x8xf32>
    %c0_17 = arith.constant 0 : index
    %c0_18 = arith.constant 0 : index
    %23 = vector.load %arg8[%c0_17, %c0_18] : memref<16x8xf32, #tpu.memory_space<vmem>>, vector<16x8xf32>
    tpu.vector_store %arg8[%c0_17, %c0_18], %22 {strides = array<i32>} : memref<16x8xf32, #tpu.memory_space<vmem>>, vector<16x8xf32>,
    return
  }
  func.func @transform_0(%arg0: i32) -> (i32, i32) {
    %c0_i32 = arith.constant 0 : i32
    %c0_i32_0 = arith.constant 0 : i32
    return %arg0, %c0_i32 : i32, i32
  }
  func.func @transform_1(%arg0: i32) -> (i32, i32) {
    %c0_i32 = arith.constant 0 : i32
    %c0_i32_0 = arith.constant 0 : i32
    %c0_i32_1 = arith.constant 0 : i32
    return %c0_i32, %c0_i32_0 : i32, i32
  }
  func.func @transform_2(%arg0: i32) -> (i32, i32) {
    %c0_i32 = arith.constant 0 : i32
    %c0_i32_0 = arith.constant 0 : i32
    %c0_i32_1 = arith.constant 0 : i32
    return %c0_i32, %c0_i32_0 : i32, i32
  }
  func.func @transform_3(%arg0: i32) -> (i32, i32) {
    %c0_i32 = arith.constant 0 : i32
    %c0_i32_0 = arith.constant 0 : i32
    %c0_i32_1 = arith.constant 0 : i32
    return %c0_i32, %c0_i32_0 : i32, i32
  }
  func.func @transform_4(%arg0: i32) -> (i32, i32) {
    %c0_i32 = arith.constant 0 : i32
    %c0_i32_0 = arith.constant 0 : i32
    %c0_i32_1 = arith.constant 0 : i32
    return %c0_i32, %c0_i32_0 : i32, i32
  }
  func.func @transform_5(%arg0: i32) -> (i32, i32) {
    %c0_i32 = arith.constant 0 : i32
    %c0_i32_0 = arith.constant 0 : i32
    %c0_i32_1 = arith.constant 0 : i32
    return %c0_i32, %c0_i32_0 : i32, i32
  }
  func.func @transform_6(%arg0: i32) -> (i32, i32) {
    %c0_i32 = arith.constant 0 : i32
    %c0_i32_0 = arith.constant 0 : i32
    %c0_i32_1 = arith.constant 0 : i32
    return %c0_i32, %c0_i32_0 : i32, i32
  }
  func.func @transform_7(%arg0: i32) -> (i32, i32) {
    %c0_i32 = arith.constant 0 : i32
    %c0_i32_0 = arith.constant 0 : i32
    return %arg0, %c0_i32 : i32, i32
  }
}

module attributes {stable_mosaic.version = 11 : i64} {
  func.func @kernel(%arg0: i32, %arg1: memref<16x16xf32, #tpu.memory_space<vmem>>, %arg2: memref<16x128xbf16, #tpu.memory_space<vmem>>, %arg3: memref<1x128xf32, #tpu.memory_space<vmem>>, %arg4: memref<128x128xbf16, #tpu.memory_space<vmem>>, %arg5: memref<1x128xf32, #tpu.memory_space<vmem>>, %arg6: memref<128x8xbf16, #tpu.memory_space<vmem>>, %arg7: memref<1x8xf32, #tpu.memory_space<vmem>>, %arg8: memref<16x8xf32, #tpu.memory_space<vmem>>) attributes {dimension_semantics = [#tpu.dimension_semantics<parallel>], iteration_bounds = array<i64: 1>, scalar_prefetch = 0 : i64, scratch_operands = 0 : i64, tpu.core_type = #tpu.core_type<tc>, window_params = [{transform_indices = @transform_0, window_bounds = array<i64: 16, 16>}, {pipeline_mode = #tpu.pipeline_mode<synchronous>, transform_indices = @transform_1, window_bounds = array<i64: 16, 128>}, {pipeline_mode = #tpu.pipeline_mode<synchronous>, transform_indices = @transform_2, window_bounds = array<i64: 1, 128>}, {pipeline_mode = #tpu.pipeline_mode<synchronous>, transform_indices = @transform_3, window_bounds = array<i64: 128, 128>}, {pipeline_mode = #tpu.pipeline_mode<synchronous>, transform_indices = @transform_4, window_bounds = array<i64: 1, 128>}, {pipeline_mode = #tpu.pipeline_mode<synchronous>, transform_indices = @transform_5, window_bounds = array<i64: 128, 8>}, {pipeline_mode = #tpu.pipeline_mode<synchronous>, transform_indices = @transform_6, window_bounds = array<i64: 1, 8>}, {transform_indices = @transform_7, window_bounds = array<i64: 16, 8>}]} {
    %c0 = arith.constant 0 : index
    %c0_0 = arith.constant 0 : index
    %0 = vector.load %arg1[%c0, %c0_0] : memref<16x16xf32, #tpu.memory_space<vmem>>, vector<16x16xf32>
    %1 = arith.truncf %0 : vector<16x16xf32> to vector<16x16xbf16>
    %c0_1 = arith.constant 0 : index
    %c0_2 = arith.constant 0 : index
    %2 = vector.load %arg2[%c0_1, %c0_2] : memref<16x128xbf16, #tpu.memory_space<vmem>>, vector<16x128xbf16>
    %cst = arith.constant dense<0.000000e+00> : vector<16x128xf32>
    %3 = tpu.matmul %1, %2, %cst {dimension_numbers = #tpu.dot_dimension_numbers<[1], [0], [0], [1], [0, 0, 1, 1], [], []>} : vector<16x16xbf16>, vector<16x128xbf16>, vector<16x128xf32> -> vector<16x128xf32>
    %c0_3 = arith.constant 0 : index
    %c0_4 = arith.constant 0 : index
    %4 = vector.load %arg3[%c0_3, %c0_4] : memref<1x128xf32, #tpu.memory_space<vmem>>, vector<1x128xf32>
    %5 = vector.broadcast %4 : vector<1x128xf32> to vector<16x128xf32>
    %6 = arith.addf %3, %5 : vector<16x128xf32>
    %cst_5 = arith.constant 0.000000e+00 : f32
    %7 = vector.broadcast %cst_5 : f32 to vector<16x128xf32>
    %8 = arith.maximumf %6, %7 : vector<16x128xf32>
    %9 = arith.truncf %8 : vector<16x128xf32> to vector<16x128xbf16>
    %c0_6 = arith.constant 0 : index
    %c0_7 = arith.constant 0 : index
    %10 = vector.load %arg4[%c0_6, %c0_7] : memref<128x128xbf16, #tpu.memory_space<vmem>>, vector<128x128xbf16>
    %cst_8 = arith.constant dense<0.000000e+00> : vector<16x128xf32>
    %11 = tpu.matmul %9, %10, %cst_8 {dimension_numbers = #tpu.dot_dimension_numbers<[1], [0], [0], [1], [0, 0, 1, 1], [], []>} : vector<16x128xbf16>, vector<128x128xbf16>, vector<16x128xf32> -> vector<16x128xf32>
    %c0_9 = arith.constant 0 : index
    %c0_10 = arith.constant 0 : index
    %12 = vector.load %arg5[%c0_9, %c0_10] : memref<1x128xf32, #tpu.memory_space<vmem>>, vector<1x128xf32>
    %13 = vector.broadcast %12 : vector<1x128xf32> to vector<16x128xf32>
    %14 = arith.addf %11, %13 : vector<16x128xf32>
    %cst_11 = arith.constant 0.000000e+00 : f32
    %15 = vector.broadcast %cst_11 : f32 to vector<16x128xf32>
    %16 = arith.maximumf %14, %15 : vector<16x128xf32>
    %17 = arith.truncf %16 : vector<16x128xf32> to vector<16x128xbf16>
    %c0_12 = arith.constant 0 : index
    %c0_13 = arith.constant 0 : index
    %18 = vector.load %arg6[%c0_12, %c0_13] : memref<128x8xbf16, #tpu.memory_space<vmem>>, vector<128x8xbf16>
    %cst_14 = arith.constant dense<0.000000e+00> : vector<16x8xf32>
    %19 = tpu.matmul %17, %18, %cst_14 {dimension_numbers = #tpu.dot_dimension_numbers<[1], [0], [0], [1], [0, 0, 1, 1], [], []>} : vector<16x128xbf16>, vector<128x8xbf16>, vector<16x8xf32> -> vector<16x8xf32>
    %c0_15 = arith.constant 0 : index
    %c0_16 = arith.constant 0 : index
    %20 = vector.load %arg7[%c0_15, %c0_16] : memref<1x8xf32, #tpu.memory_space<vmem>>, vector<1x8xf32>
    %21 = vector.broadcast %20 : vector<1x8xf32> to vector<16x8xf32>
    %22 = arith.addf %19, %21 : vector<16x8xf32>
    %c0_17 = arith.constant 0 : index
    %c0_18 = arith.constant 0 : index
    %23 = vector.load %arg8[%c0_17, %c0_18] : memref<16x8xf32, #tpu.memory_space<vmem>>, vector<16x8xf32>
    tpu.vector_store %arg8[%c0_17, %c0_18], %22 {strides = array<i32>} : memref<16x8xf32, #tpu.memory_space<vmem>>, vector<16x8xf32>,
    return
  }
  func.func @transform_0(%arg0: i32) -> (i32, i32) {
    %c0_i32 = arith.constant 0 : i32
    %c0_i32_0 = arith.constant 0 : i32
    return %arg0, %c0_i32 : i32, i32
  }
  func.func @transform_1(%arg0: i32) -> (i32, i32) {
    %c0_i32 = arith.constant 0 : i32
    %c0_i32_0 = arith.constant 0 : i32
    %c0_i32_1 = arith.constant 0 : i32
    return %c0_i32, %c0_i32_0 : i32, i32
  }
  func.func @transform_2(%arg0: i32) -> (i32, i32) {
    %c0_i32 = arith.constant 0 : i32
    %c0_i32_0 = arith.constant 0 : i32
    %c0_i32_1 = arith.constant 0 : i32
    return %c0_i32, %c0_i32_0 : i32, i32
  }
  func.func @transform_3(%arg0: i32) -> (i32, i32) {
    %c0_i32 = arith.constant 0 : i32
    %c0_i32_0 = arith.constant 0 : i32
    %c0_i32_1 = arith.constant 0 : i32
    return %c0_i32, %c0_i32_0 : i32, i32
  }
  func.func @transform_4(%arg0: i32) -> (i32, i32) {
    %c0_i32 = arith.constant 0 : i32
    %c0_i32_0 = arith.constant 0 : i32
    %c0_i32_1 = arith.constant 0 : i32
    return %c0_i32, %c0_i32_0 : i32, i32
  }
  func.func @transform_5(%arg0: i32) -> (i32, i32) {
    %c0_i32 = arith.constant 0 : i32
    %c0_i32_0 = arith.constant 0 : i32
    %c0_i32_1 = arith.constant 0 : i32
    return %c0_i32, %c0_i32_0 : i32, i32
  }
  func.func @transform_6(%arg0: i32) -> (i32, i32) {
    %c0_i32 = arith.constant 0 : i32
    %c0_i32_0 = arith.constant 0 : i32
    %c0_i32_1 = arith.constant 0 : i32
    return %c0_i32, %c0_i32_0 : i32, i32
  }
  func.func @transform_7(%arg0: i32) -> (i32, i32) {
    %c0_i32 = arith.constant 0 : i32
    %c0_i32_0 = arith.constant 0 : i32
    return %arg0, %c0_i32 : i32, i32
  }
}

</mosaic_0001>

<llo_original>
// kernel: _mlp_forward_impl.1
$region0: #{_mlp_forward_impl.1}
  #allocation0 [shape = 'u32[]', space=smem, size = 0x4, offset = 0x4, fixed_abs, tag = 'smem constant byte address 0x4 - core index']
  #allocation1 [shape = 'u32[144,128]{1,0:T(1,128)}', space=vmem, size = 0x12000, scoped, tag = 'internal scratch']
  %s0 = inlined_call_operand.vmem [shape: f32[16,16], index: 0, kind: input, shape index: {}]
  %s1 = inlined_call_operand.hbm [shape: bf16[16,128], index: 1, kind: input, shape index: {}]
  %s2 = inlined_call_operand.vmem [shape: f32[1,128], index: 2, kind: input, shape index: {}]
  %s3 = inlined_call_operand.vmem [shape: bf16[128,128], index: 3, kind: input, shape index: {}]
  %s4 = inlined_call_operand.vmem [shape: f32[1,128], index: 4, kind: input, shape index: {}]
  %s5 = inlined_call_operand.vmem [shape: bf16[128,8], index: 5, kind: input, shape index: {}]
  %s6 = inlined_call_operand.vmem [shape: f32[1,8], index: 6, kind: input, shape index: {}]
  %s7 = inlined_call_operand.hbm [shape: f32[16,8], index: 7, kind: output, shape index: {}]
  %s8 = sld [smem:[#allocation0]]
  $region42: #{_mlp_forward_impl.1} parent=0
    _
  %s10 = ssub.s32 1, %s8
  %s11 = scalar_select 0, %s10, %s8
  $region1: #{_mlp_forward_impl.1} parent=0
    #allocation2 [shape = 'u8[4096]{0}', space=vmem, size = 0x1000, scoped, tag = 'input window, operand 1, single buffered']
    #allocation3 [shape = 's32[1]{0}', space=sflag, size = 0x4, scoped, tag = 'scoped memory for _mlp_forward_impl.1']
    #allocation4 [shape = 's32[1]{0}', space=sflag, size = 0x4, scoped, tag = 'scoped memory for _mlp_forward_impl.1']
    #allocation5 [shape = 'u8[8192]{0}', space=vmem, size = 0x2000, scoped, tag = 'output window, operand 0, single buffered']
    %12 = vsyncpa [#allocation3], 0
    %13 = vsyncpa [#allocation4], 0
    // Predicated region
    $region2: #{_mlp_forward_impl.1} parent=1 // pred_check
      _
    $region3: #{_mlp_forward_impl.1} parent=1 // pred_check_branch
      %15 = sbr.rel (0) target = $region5
    $region4: #{_mlp_forward_impl.1} parent=1 // pred_region
      _
    $region5: #{_mlp_forward_impl.1} parent=1 // pred_fallthru
      _
    // Predicated region
    $region6: #{_mlp_forward_impl.1} parent=1 // pred_check
      _
    $region7: #{_mlp_forward_impl.1} parent=1 // pred_check_branch
      %17 = sbr.rel (0) target = $region9
    $region8: #{_mlp_forward_impl.1} parent=1 // pred_region
      %s19 = ssub.s32 128, 128
      %20 = vsyncadd [#allocation3], %s19
      %s21 = sshll.u32 [#allocation2], 4
      %s22 = int_to_ptr.vmem [resolvable:$true] %s21
      %27 = dma.hbm_to_vmem [thread:$0]  %s1, 128, %s22, [#allocation3], 64, 64, 4
    $region9: #{_mlp_forward_impl.1} parent=1 // pred_fallthru
      _
    // Predicated region
    $region10: #{_mlp_forward_impl.1} parent=1 // pred_check
      _
    $region11: #{_mlp_forward_impl.1} parent=1 // pred_check_branch
      %29 = sbr.rel (0) target = $region13
    $region12: #{_mlp_forward_impl.1} parent=1 // pred_region
      _
    $region13: #{_mlp_forward_impl.1} parent=1 // pred_fallthru
      _
    // Predicated region
    $region14: #{_mlp_forward_impl.1} parent=1 // pred_check
      _
    $region15: #{_mlp_forward_impl.1} parent=1 // pred_check_branch
      %31 = sbr.rel (0) target = $region17
    $region16: #{_mlp_forward_impl.1} parent=1 // pred_region
      _
    $region17: #{_mlp_forward_impl.1} parent=1 // pred_fallthru
      _
    // Predicated region
    $region18: #{_mlp_forward_impl.1} parent=1 // pred_check
      _
    $region19: #{_mlp_forward_impl.1} parent=1 // pred_check_branch
      %33 = sbr.rel (0) target = $region21
    $region20: #{_mlp_forward_impl.1} parent=1 // pred_region
      _
    $region21: #{_mlp_forward_impl.1} parent=1 // pred_fallthru
      _
    // Predicated region
    $region22: #{_mlp_forward_impl.1} parent=1 // pred_check
      _
    $region23: #{_mlp_forward_impl.1} parent=1 // pred_check_branch
      %35 = sbr.rel (0) target = $region25
    $region24: #{_mlp_forward_impl.1} parent=1 // pred_region
      _
    $region25: #{_mlp_forward_impl.1} parent=1 // pred_fallthru
      _
    // Predicated region
    $region26: #{_mlp_forward_impl.1} parent=1 // pred_check
      _
    $region27: #{_mlp_forward_impl.1} parent=1 // pred_check_branch
      %37 = sbr.rel (0) target = $region29
    $region28: #{_mlp_forward_impl.1} parent=1 // pred_region
      _
    $region29: #{_mlp_forward_impl.1} parent=1 // pred_fallthru
      _
    // Predicated region
    $region30: #{_mlp_forward_impl.1} parent=1 // pred_check
      _
    $region31: #{_mlp_forward_impl.1} parent=1 // pred_check_branch
      %39 = sbr.rel (0) target = $region33
    $region32: #{_mlp_forward_impl.1} parent=1 // pred_region
      %40 = dma.done [#allocation3], 128
    $region33: #{_mlp_forward_impl.1} parent=1 // pred_fallthru
      _
    %v42 = vld [vmem:[%s0] sm:$0xff]
    %v43 = vld [vmem:[%s0 + $0x8] sm:$0xff]
    %v44 = vpack.c.bf16 %v43, %v42
    %v45 = vld [vmem:[#allocation2] sm:$0xf]
    %v46 = vld [vmem:[#allocation2 + $0x4] sm:$0xf]
    %v47 = vld [vmem:[%s2] sm:$0x1]
    %v49 = vlaneseq
    %v50 = vshrl.u32 %v49, 7
    %v51 = vsub.s32 0, %v50
    %v52 = vrot.slane %v47, %v51
    %v56 = vunpack.c.l.b16 %v45
    %v57 = vunpack.c.l.b16 %v46
    %v58 = vpack.c.b16 %v57, %v56
    %vm60 = vcmask 130048
    %v62 = vsel %vm60, %v44, 0
    %64 = vmatprep.subr.bf16.mxu0 0
    %65 = vmatpush1.bf16.msra.mxu0 %v58
    %66 = vmatprep.subr.bf16.mxu0 0
    %67 = vmatpush1.bf16.msra.mxu0 0
    %68 = vmatprep.subr.bf16.mxu0 0
    %69 = vmatpush1.bf16.msra.mxu0 0
    %70 = vmatprep.subr.bf16.mxu0 0
    %71 = vmatpush1.bf16.msra.mxu0 0
    %72 = vmatprep.subr.bf16.mxu0 0
    %73 = vmatpush1.bf16.msra.mxu0 0
    %74 = vmatprep.subr.bf16.mxu0 0
    %75 = vmatpush1.bf16.msra.mxu0 0
    %76 = vmatprep.subr.bf16.mxu0 0
    %77 = vmatpush1.bf16.msra.mxu0 0
    %78 = vmatprep.subr.bf16.mxu0 0
    %79 = vmatpush1.bf16.msra.mxu0 0
    %80 = vmatprep.subr.bf16.mxu0 0
    %81 = vmatpush1.bf16.msra.mxu0 0
    %82 = vmatprep.subr.bf16.mxu0 0
    %83 = vmatpush1.bf16.msra.mxu0 0
    %84 = vmatprep.subr.bf16.mxu0 0
    %85 = vmatpush1.bf16.msra.mxu0 0
    %86 = vmatprep.subr.bf16.mxu0 0
    %87 = vmatpush1.bf16.msra.mxu0 0
    %88 = vmatprep.subr.bf16.mxu0 0
    %89 = vmatpush1.bf16.msra.mxu0 0
    %90 = vmatprep.subr.bf16.mxu0 0
    %91 = vmatpush1.bf16.msra.mxu0 0
    %92 = vmatprep.subr.bf16.mxu0 0
    %93 = vmatpush1.bf16.msra.mxu0 0
    %94 = vmatprep.subr.bf16.mxu0 0
    %95 = vmatpush1.bf16.msra.mxu0 0
    %96 = vmatprep.mubr.bf16.mxu0 0
    %97 = vmatmul.mubr.bf16.gmra.mrb[0].mxu0 %v62
    %v98 = vpop.f32.mrb[0].mxu0
    %v99 = vadd.f32 %v52, %v98
    %v100 = vpop.f32.mrb[0].mxu0
    %v101 = vpop.f32.mrb[0].mxu0
    %v102 = vadd.f32 %v52, %v101
    %v103 = vpop.f32.mrb[0].mxu0
    %104 = vdwg.mxu0
    %v105 = vmax.f32 %v99, 0.0
    %v106 = vmax.f32 %v102, 0.0
    %v107 = vpack.c.bf16 %v106, %v105
    %v108 = vld [vmem:[%s3] sm:$0xf]
    %v109 = vld [vmem:[%s3 + $0x4] sm:$0xf]
    %v110 = vld [vmem:[%s3 + $0x8] sm:$0xf]
    %v111 = vld [vmem:[%s3 + $0xc] sm:$0xf]
    %v112 = vld [vmem:[%s3 + $0x10] sm:$0xf]
    %v113 = vld [vmem:[%s3 + $0x14] sm:$0xf]
    %v114 = vld [vmem:[%s3 + $0x18] sm:$0xf]
    %v115 = vld [vmem:[%s3 + $0x1c] sm:$0xf]
    %v116 = vld [vmem:[%s3 + $0x20] sm:$0xf]
    %v117 = vld [vmem:[%s3 + $0x24] sm:$0xf]
    %v118 = vld [vmem:[%s3 + $0x28] sm:$0xf]
    %v119 = vld [vmem:[%s3 + $0x2c] sm:$0xf]
    %v120 = vld [vmem:[%s3 + $0x30] sm:$0xf]
    %v121 = vld [vmem:[%s3 + $0x34] sm:$0xf]
    %v122 = vld [vmem:[%s3 + $0x38] sm:$0xf]
    %v123 = vld [vmem:[%s3 + $0x3c] sm:$0xf]
    %v124 = vld [vmem:[%s4] sm:$0x1]
    %v126 = vlaneseq
    %v127 = vshrl.u32 %v126, 7
    %v128 = vsub.s32 0, %v127
    %v129 = vrot.slane %v124, %v128
    %v147 = vunpack.c.l.b16 %v108
    %v148 = vunpack.c.l.b16 %v109
    %v149 = vunpack.c.l.b16 %v110
    %v150 = vunpack.c.l.b16 %v111
    %v151 = vunpack.c.l.b16 %v112
    %v152 = vunpack.c.l.b16 %v113
    %v153 = vunpack.c.l.b16 %v114
    %v154 = vunpack.c.l.b16 %v115
    %v155 = vunpack.c.l.b16 %v116
    %v156 = vunpack.c.l.b16 %v117
    %v157 = vunpack.c.l.b16 %v118
    %v158 = vunpack.c.l.b16 %v119
    %v159 = vunpack.c.l.b16 %v120
    %v160 = vunpack.c.l.b16 %v121
    %v161 = vunpack.c.l.b16 %v122
    %v162 = vunpack.c.l.b16 %v123
    %v163 = vpack.c.b16 %v148, %v147
    %v164 = vpack.c.b16 %v150, %v149
    %v165 = vpack.c.b16 %v152, %v151
    %v166 = vpack.c.b16 %v154, %v153
    %v167 = vpack.c.b16 %v156, %v155
    %v168 = vpack.c.b16 %v158, %v157
    %v169 = vpack.c.b16 %v160, %v159
    %v170 = vpack.c.b16 %v162, %v161
    %179 = vmatprep.subr.bf16.mxu0 0
    %180 = vmatpush1.bf16.msra.mxu0 %v163
    %181 = vmatprep.subr.bf16.mxu0 0
    %182 = vmatpush1.bf16.msra.mxu0 %v164
    %183 = vmatprep.subr.bf16.mxu0 0
    %184 = vmatpush1.bf16.msra.mxu0 %v165
    %185 = vmatprep.subr.bf16.mxu0 0
    %186 = vmatpush1.bf16.msra.mxu0 %v166
    %187 = vmatprep.subr.bf16.mxu0 0
    %188 = vmatpush1.bf16.msra.mxu0 %v167
    %189 = vmatprep.subr.bf16.mxu0 0
    %190 = vmatpush1.bf16.msra.mxu0 %v168
    %191 = vmatprep.subr.bf16.mxu0 0
    %192 = vmatpush1.bf16.msra.mxu0 %v169
    %193 = vmatprep.subr.bf16.mxu0 0
    %194 = vmatpush1.bf16.msra.mxu0 %v170
    %195 = vmatprep.subr.bf16.mxu0 0
    %196 = vmatpush1.bf16.msra.mxu0 0
    %197 = vmatprep.subr.bf16.mxu0 0
    %198 = vmatpush1.bf16.msra.mxu0 0
    %199 = vmatprep.subr.bf16.mxu0 0
    %200 = vmatpush1.bf16.msra.mxu0 0
    %201 = vmatprep.subr.bf16.mxu0 0
    %202 = vmatpush1.bf16.msra.mxu0 0
    %203 = vmatprep.subr.bf16.mxu0 0
    %204 = vmatpush1.bf16.msra.mxu0 0
    %205 = vmatprep.subr.bf16.mxu0 0
    %206 = vmatpush1.bf16.msra.mxu0 0
    %207 = vmatprep.subr.bf16.mxu0 0
    %208 = vmatpush1.bf16.msra.mxu0 0
    %209 = vmatprep.subr.bf16.mxu0 0
    %210 = vmatpush1.bf16.msra.mxu0 0
    %211 = vmatprep.mubr.bf16.mxu0 0
    %212 = vmatmul.mubr.bf16.gmra.mrb[0].mxu0 %v107
    %v213 = vpop.f32.mrb[0].mxu0
    %v214 = vadd.f32 %v129, %v213
    %v215 = vpop.f32.mrb[0].mxu0
    %v216 = vpop.f32.mrb[0].mxu0
    %v217 = vadd.f32 %v129, %v216
    %v218 = vpop.f32.mrb[0].mxu0
    %219 = vdwg.mxu0
    %v220 = vmax.f32 %v214, 0.0
    %v221 = vmax.f32 %v217, 0.0
    %v222 = vpack.c.bf16 %v221, %v220
    %v223 = vld [vmem:[%s5] sm:$0xf]
    %v224 = vld [vmem:[%s5 + $0x4] sm:$0xf]
    %v225 = vld [vmem:[%s5 + $0x8] sm:$0xf]
    %v226 = vld [vmem:[%s5 + $0xc] sm:$0xf]
    %v227 = vld [vmem:[%s5 + $0x10] sm:$0xf]
    %v228 = vld [vmem:[%s5 + $0x14] sm:$0xf]
    %v229 = vld [vmem:[%s5 + $0x18] sm:$0xf]
    %v230 = vld [vmem:[%s5 + $0x1c] sm:$0xf]
    %v231 = vld [vmem:[%s5 + $0x20] sm:$0xf]
    %v232 = vld [vmem:[%s5 + $0x24] sm:$0xf]
    %v233 = vld [vmem:[%s5 + $0x28] sm:$0xf]
    %v234 = vld [vmem:[%s5 + $0x2c] sm:$0xf]
    %v235 = vld [vmem:[%s5 + $0x30] sm:$0xf]
    %v236 = vld [vmem:[%s5 + $0x34] sm:$0xf]
    %v237 = vld [vmem:[%s5 + $0x38] sm:$0xf]
    %v238 = vld [vmem:[%s5 + $0x3c] sm:$0xf]
    %v239 = vld [vmem:[%s6] sm:$0x1]
    %v241 = vlaneseq
    %v242 = vshrl.u32 %v241, 7
    %v243 = vsub.s32 0, %v242
    %v244 = vrot.slane %v239, %v243
    %v262 = vunpack.c.l.b16 %v223
    %v263 = vunpack.c.l.b16 %v224
    %v264 = vunpack.c.l.b16 %v225
    %v265 = vunpack.c.l.b16 %v226
    %v266 = vunpack.c.l.b16 %v227
    %v267 = vunpack.c.l.b16 %v228
    %v268 = vunpack.c.l.b16 %v229
    %v269 = vunpack.c.l.b16 %v230
    %v270 = vunpack.c.l.b16 %v231
    %v271 = vunpack.c.l.b16 %v232
    %v272 = vunpack.c.l.b16 %v233
    %v273 = vunpack.c.l.b16 %v234
    %v274 = vunpack.c.l.b16 %v235
    %v275 = vunpack.c.l.b16 %v236
    %v276 = vunpack.c.l.b16 %v237
    %v277 = vunpack.c.l.b16 %v238
    %v278 = vpack.c.b16 %v263, %v262
    %v279 = vpack.c.b16 %v265, %v264
    %v280 = vpack.c.b16 %v267, %v266
    %v281 = vpack.c.b16 %v269, %v268
    %v282 = vpack.c.b16 %v271, %v270
    %v283 = vpack.c.b16 %v273, %v272
    %v284 = vpack.c.b16 %v275, %v274
    %v285 = vpack.c.b16 %v277, %v276
    %294 = vmatprep.subr.bf16.mxu0 0
    %295 = vmatpush1.bf16.msra.mxu0 %v278
    %296 = vmatprep.subr.bf16.mxu0 0
    %297 = vmatpush1.bf16.msra.mxu0 %v279
    %298 = vmatprep.subr.bf16.mxu0 0
    %299 = vmatpush1.bf16.msra.mxu0 %v280
    %300 = vmatprep.subr.bf16.mxu0 0
    %301 = vmatpush1.bf16.msra.mxu0 %v281
    %302 = vmatprep.subr.bf16.mxu0 0
    %303 = vmatpush1.bf16.msra.mxu0 %v282
    %304 = vmatprep.subr.bf16.mxu0 0
    %305 = vmatpush1.bf16.msra.mxu0 %v283
    %306 = vmatprep.subr.bf16.mxu0 0
    %307 = vmatpush1.bf16.msra.mxu0 %v284
    %308 = vmatprep.subr.bf16.mxu0 0
    %309 = vmatpush1.bf16.msra.mxu0 %v285
    %310 = vmatprep.subr.bf16.mxu0 0
    %311 = vmatpush1.bf16.msra.mxu0 0
    %312 = vmatprep.subr.bf16.mxu0 0
    %313 = vmatpush1.bf16.msra.mxu0 0
    %314 = vmatprep.subr.bf16.mxu0 0
    %315 = vmatpush1.bf16.msra.mxu0 0
    %316 = vmatprep.subr.bf16.mxu0 0
    %317 = vmatpush1.bf16.msra.mxu0 0
    %318 = vmatprep.subr.bf16.mxu0 0
    %319 = vmatpush1.bf16.msra.mxu0 0
    %320 = vmatprep.subr.bf16.mxu0 0
    %321 = vmatpush1.bf16.msra.mxu0 0
    %322 = vmatprep.subr.bf16.mxu0 0
    %323 = vmatpush1.bf16.msra.mxu0 0
    %324 = vmatprep.subr.bf16.mxu0 0
    %325 = vmatpush1.bf16.msra.mxu0 0
    %326 = vmatprep.mubr.bf16.mxu0 0
    %327 = vmatmul.mubr.bf16.gmra.mrb[0].mxu0 %v222
    %v328 = vpop.f32.mrb[0].mxu0
    %v329 = vadd.f32 %v244, %v328
    %v330 = vpop.f32.mrb[0].mxu0
    %v331 = vpop.f32.mrb[0].mxu0
    %v332 = vadd.f32 %v244, %v331
    %v333 = vpop.f32.mrb[0].mxu0
    %334 = vdwg.mxu0
    %vm335 = vcmask 64512
    %336 = vst.msk [vmem:[#allocation5] sm:$0xff] %vm335, %v329
    %337 = vst.msk [vmem:[#allocation5 + $0x8] sm:$0xff] %vm335, %v332
    // Predicated region
    $region34: #{_mlp_forward_impl.1} parent=1 // pred_check
      _
    $region35: #{_mlp_forward_impl.1} parent=1 // pred_check_branch
      %339 = sbr.rel (0) target = $region37
    $region36: #{_mlp_forward_impl.1} parent=1 // pred_region
      %s341 = ssub.s32 256, 256
      %342 = vsyncadd [#allocation4], %s341
      %s343 = sshll.u32 [#allocation5], 4
      %s344 = int_to_ptr.vmem [resolvable:$true] %s343
      %349 = dma.vmem_to_hbm [thread:$0]  %s344, 256, %s7, [#allocation4], 128, 128, 8
    $region37: #{_mlp_forward_impl.1} parent=1 // pred_fallthru
      _
    // Predicated region
    $region38: #{_mlp_forward_impl.1} parent=1 // pred_check
      _
    $region39: #{_mlp_forward_impl.1} parent=1 // pred_check_branch
      %351 = sbr.rel (0) target = $region41
    $region40: #{_mlp_forward_impl.1} parent=1 // pred_region
      %352 = dma.done [#allocation4], 256
    $region41: #{_mlp_forward_impl.1} parent=1 // pred_fallthru
      _
    %353 = vsyncpa [#allocation3], 1
    %354 = vsyncpa [#allocation4], 1

// kernel: _mlp_forward_impl.1
$region0: #{_mlp_forward_impl.1}
  #allocation0 [shape = 'u32[]', space=smem, size = 0x4, offset = 0x4, fixed_abs, tag = 'smem constant byte address 0x4 - core index']
  #allocation1 [shape = 'u32[144,128]{1,0:T(1,128)}', space=vmem, size = 0x12000, scoped, tag = 'internal scratch']
  %s0 = inlined_call_operand.vmem [shape: f32[16,16], index: 0, kind: input, shape index: {}]
  %s1 = inlined_call_operand.hbm [shape: bf16[16,128], index: 1, kind: input, shape index: {}]
  %s2 = inlined_call_operand.vmem [shape: f32[1,128], index: 2, kind: input, shape index: {}]
  %s3 = inlined_call_operand.vmem [shape: bf16[128,128], index: 3, kind: input, shape index: {}]
  %s4 = inlined_call_operand.vmem [shape: f32[1,128], index: 4, kind: input, shape index: {}]
  %s5 = inlined_call_operand.vmem [shape: bf16[128,8], index: 5, kind: input, shape index: {}]
  %s6 = inlined_call_operand.vmem [shape: f32[1,8], index: 6, kind: input, shape index: {}]
  %s7 = inlined_call_operand.hbm [shape: f32[16,8], index: 7, kind: output, shape index: {}]
  %s8 = sld [smem:[#allocation0]]
  $region42: #{_mlp_forward_impl.1} parent=0
    _
  %s10 = ssub.s32 1, %s8
  %s11 = scalar_select 0, %s10, %s8
  $region1: #{_mlp_forward_impl.1} parent=0
    #allocation2 [shape = 'u8[4096]{0}', space=vmem, size = 0x1000, scoped, tag = 'input window, operand 1, single buffered']
    #allocation3 [shape = 's32[1]{0}', space=sflag, size = 0x4, scoped, tag = 'scoped memory for _mlp_forward_impl.1']
    #allocation4 [shape = 's32[1]{0}', space=sflag, size = 0x4, scoped, tag = 'scoped memory for _mlp_forward_impl.1']
    #allocation5 [shape = 'u8[8192]{0}', space=vmem, size = 0x2000, scoped, tag = 'output window, operand 0, single buffered']
    %12 = vsyncpa [#allocation3], 0
    %13 = vsyncpa [#allocation4], 0
    // Predicated region
    $region2: #{_mlp_forward_impl.1} parent=1 // pred_check
      _
    $region3: #{_mlp_forward_impl.1} parent=1 // pred_check_branch
      %15 = sbr.rel (0) target = $region5
    $region4: #{_mlp_forward_impl.1} parent=1 // pred_region
      _
    $region5: #{_mlp_forward_impl.1} parent=1 // pred_fallthru
      _
    // Predicated region
    $region6: #{_mlp_forward_impl.1} parent=1 // pred_check
      _
    $region7: #{_mlp_forward_impl.1} parent=1 // pred_check_branch
      %17 = sbr.rel (0) target = $region9
    $region8: #{_mlp_forward_impl.1} parent=1 // pred_region
      %s19 = ssub.s32 128, 128
      %20 = vsyncadd [#allocation3], %s19
      %s21 = sshll.u32 [#allocation2], 4
      %s22 = int_to_ptr.vmem [resolvable:$true] %s21
      %27 = dma.hbm_to_vmem [thread:$0]  %s1, 128, %s22, [#allocation3], 64, 64, 4
    $region9: #{_mlp_forward_impl.1} parent=1 // pred_fallthru
      _
    // Predicated region
    $region10: #{_mlp_forward_impl.1} parent=1 // pred_check
      _
    $region11: #{_mlp_forward_impl.1} parent=1 // pred_check_branch
      %29 = sbr.rel (0) target = $region13
    $region12: #{_mlp_forward_impl.1} parent=1 // pred_region
      _
    $region13: #{_mlp_forward_impl.1} parent=1 // pred_fallthru
      _
    // Predicated region
    $region14: #{_mlp_forward_impl.1} parent=1 // pred_check
      _
    $region15: #{_mlp_forward_impl.1} parent=1 // pred_check_branch
      %31 = sbr.rel (0) target = $region17
    $region16: #{_mlp_forward_impl.1} parent=1 // pred_region
      _
    $region17: #{_mlp_forward_impl.1} parent=1 // pred_fallthru
      _
    // Predicated region
    $region18: #{_mlp_forward_impl.1} parent=1 // pred_check
      _
    $region19: #{_mlp_forward_impl.1} parent=1 // pred_check_branch
      %33 = sbr.rel (0) target = $region21
    $region20: #{_mlp_forward_impl.1} parent=1 // pred_region
      _
    $region21: #{_mlp_forward_impl.1} parent=1 // pred_fallthru
      _
    // Predicated region
    $region22: #{_mlp_forward_impl.1} parent=1 // pred_check
      _
    $region23: #{_mlp_forward_impl.1} parent=1 // pred_check_branch
      %35 = sbr.rel (0) target = $region25
    $region24: #{_mlp_forward_impl.1} parent=1 // pred_region
      _
    $region25: #{_mlp_forward_impl.1} parent=1 // pred_fallthru
      _
    // Predicated region
    $region26: #{_mlp_forward_impl.1} parent=1 // pred_check
      _
    $region27: #{_mlp_forward_impl.1} parent=1 // pred_check_branch
      %37 = sbr.rel (0) target = $region29
    $region28: #{_mlp_forward_impl.1} parent=1 // pred_region
      _
    $region29: #{_mlp_forward_impl.1} parent=1 // pred_fallthru
      _
    // Predicated region
    $region30: #{_mlp_forward_impl.1} parent=1 // pred_check
      _
    $region31: #{_mlp_forward_impl.1} parent=1 // pred_check_branch
      %39 = sbr.rel (0) target = $region33
    $region32: #{_mlp_forward_impl.1} parent=1 // pred_region
      %40 = dma.done [#allocation3], 128
    $region33: #{_mlp_forward_impl.1} parent=1 // pred_fallthru
      _
    %v42 = vld [vmem:[%s0] sm:$0xff]
    %v43 = vld [vmem:[%s0 + $0x8] sm:$0xff]
    %v44 = vpack.c.bf16 %v43, %v42
    %v45 = vld [vmem:[#allocation2] sm:$0xf]
    %v46 = vld [vmem:[#allocation2 + $0x4] sm:$0xf]
    %v47 = vld [vmem:[%s2] sm:$0x1]
    %v49 = vlaneseq
    %v50 = vshrl.u32 %v49, 7
    %v51 = vsub.s32 0, %v50
    %v52 = vrot.slane %v47, %v51
    %v56 = vunpack.c.l.b16 %v45
    %v57 = vunpack.c.l.b16 %v46
    %v58 = vpack.c.b16 %v57, %v56
    %vm60 = vcmask 130048
    %v62 = vsel %vm60, %v44, 0
    %64 = vmatprep.subr.bf16.mxu0 0
    %65 = vmatpush1.bf16.msra.mxu0 %v58
    %66 = vmatprep.subr.bf16.mxu0 0
    %67 = vmatpush1.bf16.msra.mxu0 0
    %68 = vmatprep.subr.bf16.mxu0 0
    %69 = vmatpush1.bf16.msra.mxu0 0
    %70 = vmatprep.subr.bf16.mxu0 0
    %71 = vmatpush1.bf16.msra.mxu0 0
    %72 = vmatprep.subr.bf16.mxu0 0
    %73 = vmatpush1.bf16.msra.mxu0 0
    %74 = vmatprep.subr.bf16.mxu0 0
    %75 = vmatpush1.bf16.msra.mxu0 0
    %76 = vmatprep.subr.bf16.mxu0 0
    %77 = vmatpush1.bf16.msra.mxu0 0
    %78 = vmatprep.subr.bf16.mxu0 0
    %79 = vmatpush1.bf16.msra.mxu0 0
    %80 = vmatprep.subr.bf16.mxu0 0
    %81 = vmatpush1.bf16.msra.mxu0 0
    %82 = vmatprep.subr.bf16.mxu0 0
    %83 = vmatpush1.bf16.msra.mxu0 0
    %84 = vmatprep.subr.bf16.mxu0 0
    %85 = vmatpush1.bf16.msra.mxu0 0
    %86 = vmatprep.subr.bf16.mxu0 0
    %87 = vmatpush1.bf16.msra.mxu0 0
    %88 = vmatprep.subr.bf16.mxu0 0
    %89 = vmatpush1.bf16.msra.mxu0 0
    %90 = vmatprep.subr.bf16.mxu0 0
    %91 = vmatpush1.bf16.msra.mxu0 0
    %92 = vmatprep.subr.bf16.mxu0 0
    %93 = vmatpush1.bf16.msra.mxu0 0
    %94 = vmatprep.subr.bf16.mxu0 0
    %95 = vmatpush1.bf16.msra.mxu0 0
    %96 = vmatprep.mubr.bf16.mxu0 0
    %97 = vmatmul.mubr.bf16.gmra.mrb[0].mxu0 %v62
    %v98 = vpop.f32.mrb[0].mxu0
    %v99 = vadd.f32 %v52, %v98
    %v100 = vpop.f32.mrb[0].mxu0
    %v101 = vpop.f32.mrb[0].mxu0
    %v102 = vadd.f32 %v52, %v101
    %v103 = vpop.f32.mrb[0].mxu0
    %104 = vdwg.mxu0
    %v105 = vmax.f32 %v99, 0.0
    %v106 = vmax.f32 %v102, 0.0
    %v107 = vpack.c.bf16 %v106, %v105
    %v108 = vld [vmem:[%s3] sm:$0xf]
    %v109 = vld [vmem:[%s3 + $0x4] sm:$0xf]
    %v110 = vld [vmem:[%s3 + $0x8] sm:$0xf]
    %v111 = vld [vmem:[%s3 + $0xc] sm:$0xf]
    %v112 = vld [vmem:[%s3 + $0x10] sm:$0xf]
    %v113 = vld [vmem:[%s3 + $0x14] sm:$0xf]
    %v114 = vld [vmem:[%s3 + $0x18] sm:$0xf]
    %v115 = vld [vmem:[%s3 + $0x1c] sm:$0xf]
    %v116 = vld [vmem:[%s3 + $0x20] sm:$0xf]
    %v117 = vld [vmem:[%s3 + $0x24] sm:$0xf]
    %v118 = vld [vmem:[%s3 + $0x28] sm:$0xf]
    %v119 = vld [vmem:[%s3 + $0x2c] sm:$0xf]
    %v120 = vld [vmem:[%s3 + $0x30] sm:$0xf]
    %v121 = vld [vmem:[%s3 + $0x34] sm:$0xf]
    %v122 = vld [vmem:[%s3 + $0x38] sm:$0xf]
    %v123 = vld [vmem:[%s3 + $0x3c] sm:$0xf]
    %v124 = vld [vmem:[%s4] sm:$0x1]
    %v126 = vlaneseq
    %v127 = vshrl.u32 %v126, 7
    %v128 = vsub.s32 0, %v127
    %v129 = vrot.slane %v124, %v128
    %v147 = vunpack.c.l.b16 %v108
    %v148 = vunpack.c.l.b16 %v109
    %v149 = vunpack.c.l.b16 %v110
    %v150 = vunpack.c.l.b16 %v111
    %v151 = vunpack.c.l.b16 %v112
    %v152 = vunpack.c.l.b16 %v113
    %v153 = vunpack.c.l.b16 %v114
    %v154 = vunpack.c.l.b16 %v115
    %v155 = vunpack.c.l.b16 %v116
    %v156 = vunpack.c.l.b16 %v117
    %v157 = vunpack.c.l.b16 %v118
    %v158 = vunpack.c.l.b16 %v119
    %v159 = vunpack.c.l.b16 %v120
    %v160 = vunpack.c.l.b16 %v121
    %v161 = vunpack.c.l.b16 %v122
    %v162 = vunpack.c.l.b16 %v123
    %v163 = vpack.c.b16 %v148, %v147
    %v164 = vpack.c.b16 %v150, %v149
    %v165 = vpack.c.b16 %v152, %v151
    %v166 = vpack.c.b16 %v154, %v153
    %v167 = vpack.c.b16 %v156, %v155
    %v168 = vpack.c.b16 %v158, %v157
    %v169 = vpack.c.b16 %v160, %v159
    %v170 = vpack.c.b16 %v162, %v161
    %179 = vmatprep.subr.bf16.mxu0 0
    %180 = vmatpush1.bf16.msra.mxu0 %v163
    %181 = vmatprep.subr.bf16.mxu0 0
    %182 = vmatpush1.bf16.msra.mxu0 %v164
    %183 = vmatprep.subr.bf16.mxu0 0
    %184 = vmatpush1.bf16.msra.mxu0 %v165
    %185 = vmatprep.subr.bf16.mxu0 0
    %186 = vmatpush1.bf16.msra.mxu0 %v166
    %187 = vmatprep.subr.bf16.mxu0 0
    %188 = vmatpush1.bf16.msra.mxu0 %v167
    %189 = vmatprep.subr.bf16.mxu0 0
    %190 = vmatpush1.bf16.msra.mxu0 %v168
    %191 = vmatprep.subr.bf16.mxu0 0
    %192 = vmatpush1.bf16.msra.mxu0 %v169
    %193 = vmatprep.subr.bf16.mxu0 0
    %194 = vmatpush1.bf16.msra.mxu0 %v170
    %195 = vmatprep.subr.bf16.mxu0 0
    %196 = vmatpush1.bf16.msra.mxu0 0
    %197 = vmatprep.subr.bf16.mxu0 0
    %198 = vmatpush1.bf16.msra.mxu0 0
    %199 = vmatprep.subr.bf16.mxu0 0
    %200 = vmatpush1.bf16.msra.mxu0 0
    %201 = vmatprep.subr.bf16.mxu0 0
    %202 = vmatpush1.bf16.msra.mxu0 0
    %203 = vmatprep.subr.bf16.mxu0 0
    %204 = vmatpush1.bf16.msra.mxu0 0
    %205 = vmatprep.subr.bf16.mxu0 0
    %206 = vmatpush1.bf16.msra.mxu0 0
    %207 = vmatprep.subr.bf16.mxu0 0
    %208 = vmatpush1.bf16.msra.mxu0 0
    %209 = vmatprep.subr.bf16.mxu0 0
    %210 = vmatpush1.bf16.msra.mxu0 0
    %211 = vmatprep.mubr.bf16.mxu0 0
    %212 = vmatmul.mubr.bf16.gmra.mrb[0].mxu0 %v107
    %v213 = vpop.f32.mrb[0].mxu0
    %v214 = vadd.f32 %v129, %v213
    %v215 = vpop.f32.mrb[0].mxu0
    %v216 = vpop.f32.mrb[0].mxu0
    %v217 = vadd.f32 %v129, %v216
    %v218 = vpop.f32.mrb[0].mxu0
    %219 = vdwg.mxu0
    %v220 = vmax.f32 %v214, 0.0
    %v221 = vmax.f32 %v217, 0.0
    %v222 = vpack.c.bf16 %v221, %v220
    %v223 = vld [vmem:[%s5] sm:$0xf]
    %v224 = vld [vmem:[%s5 + $0x4] sm:$0xf]
    %v225 = vld [vmem:[%s5 + $0x8] sm:$0xf]
    %v226 = vld [vmem:[%s5 + $0xc] sm:$0xf]
    %v227 = vld [vmem:[%s5 + $0x10] sm:$0xf]
    %v228 = vld [vmem:[%s5 + $0x14] sm:$0xf]
    %v229 = vld [vmem:[%s5 + $0x18] sm:$0xf]
    %v230 = vld [vmem:[%s5 + $0x1c] sm:$0xf]
    %v231 = vld [vmem:[%s5 + $0x20] sm:$0xf]
    %v232 = vld [vmem:[%s5 + $0x24] sm:$0xf]
    %v233 = vld [vmem:[%s5 + $0x28] sm:$0xf]
    %v234 = vld [vmem:[%s5 + $0x2c] sm:$0xf]
    %v235 = vld [vmem:[%s5 + $0x30] sm:$0xf]
    %v236 = vld [vmem:[%s5 + $0x34] sm:$0xf]
    %v237 = vld [vmem:[%s5 + $0x38] sm:$0xf]
    %v238 = vld [vmem:[%s5 + $0x3c] sm:$0xf]
    %v239 = vld [vmem:[%s6] sm:$0x1]
    %v241 = vlaneseq
    %v242 = vshrl.u32 %v241, 7
    %v243 = vsub.s32 0, %v242
    %v244 = vrot.slane %v239, %v243
    %v262 = vunpack.c.l.b16 %v223
    %v263 = vunpack.c.l.b16 %v224
    %v264 = vunpack.c.l.b16 %v225
    %v265 = vunpack.c.l.b16 %v226
    %v266 = vunpack.c.l.b16 %v227
    %v267 = vunpack.c.l.b16 %v228
    %v268 = vunpack.c.l.b16 %v229
    %v269 = vunpack.c.l.b16 %v230
    %v270 = vunpack.c.l.b16 %v231
    %v271 = vunpack.c.l.b16 %v232
    %v272 = vunpack.c.l.b16 %v233
    %v273 = vunpack.c.l.b16 %v234
    %v274 = vunpack.c.l.b16 %v235
    %v275 = vunpack.c.l.b16 %v236
    %v276 = vunpack.c.l.b16 %v237
    %v277 = vunpack.c.l.b16 %v238
    %v278 = vpack.c.b16 %v263, %v262
    %v279 = vpack.c.b16 %v265, %v264
    %v280 = vpack.c.b16 %v267, %v266
    %v281 = vpack.c.b16 %v269, %v268
    %v282 = vpack.c.b16 %v271, %v270
    %v283 = vpack.c.b16 %v273, %v272
    %v284 = vpack.c.b16 %v275, %v274
    %v285 = vpack.c.b16 %v277, %v276
    %294 = vmatprep.subr.bf16.mxu0 0
    %295 = vmatpush1.bf16.msra.mxu0 %v278
    %296 = vmatprep.subr.bf16.mxu0 0
    %297 = vmatpush1.bf16.msra.mxu0 %v279
    %298 = vmatprep.subr.bf16.mxu0 0
    %299 = vmatpush1.bf16.msra.mxu0 %v280
    %300 = vmatprep.subr.bf16.mxu0 0
    %301 = vmatpush1.bf16.msra.mxu0 %v281
    %302 = vmatprep.subr.bf16.mxu0 0
    %303 = vmatpush1.bf16.msra.mxu0 %v282
    %304 = vmatprep.subr.bf16.mxu0 0
    %305 = vmatpush1.bf16.msra.mxu0 %v283
    %306 = vmatprep.subr.bf16.mxu0 0
    %307 = vmatpush1.bf16.msra.mxu0 %v284
    %308 = vmatprep.subr.bf16.mxu0 0
    %309 = vmatpush1.bf16.msra.mxu0 %v285
    %310 = vmatprep.subr.bf16.mxu0 0
    %311 = vmatpush1.bf16.msra.mxu0 0
    %312 = vmatprep.subr.bf16.mxu0 0
    %313 = vmatpush1.bf16.msra.mxu0 0
    %314 = vmatprep.subr.bf16.mxu0 0
    %315 = vmatpush1.bf16.msra.mxu0 0
    %316 = vmatprep.subr.bf16.mxu0 0
    %317 = vmatpush1.bf16.msra.mxu0 0
    %318 = vmatprep.subr.bf16.mxu0 0
    %319 = vmatpush1.bf16.msra.mxu0 0
    %320 = vmatprep.subr.bf16.mxu0 0
    %321 = vmatpush1.bf16.msra.mxu0 0
    %322 = vmatprep.subr.bf16.mxu0 0
    %323 = vmatpush1.bf16.msra.mxu0 0
    %324 = vmatprep.subr.bf16.mxu0 0
    %325 = vmatpush1.bf16.msra.mxu0 0
    %326 = vmatprep.mubr.bf16.mxu0 0
    %327 = vmatmul.mubr.bf16.gmra.mrb[0].mxu0 %v222
    %v328 = vpop.f32.mrb[0].mxu0
    %v329 = vadd.f32 %v244, %v328
    %v330 = vpop.f32.mrb[0].mxu0
    %v331 = vpop.f32.mrb[0].mxu0
    %v332 = vadd.f32 %v244, %v331
    %v333 = vpop.f32.mrb[0].mxu0
    %334 = vdwg.mxu0
    %vm335 = vcmask 64512
    %336 = vst.msk [vmem:[#allocation5] sm:$0xff] %vm335, %v329
    %337 = vst.msk [vmem:[#allocation5 + $0x8] sm:$0xff] %vm335, %v332
    // Predicated region
    $region34: #{_mlp_forward_impl.1} parent=1 // pred_check
      _
    $region35: #{_mlp_forward_impl.1} parent=1 // pred_check_branch
      %339 = sbr.rel (0) target = $region37
    $region36: #{_mlp_forward_impl.1} parent=1 // pred_region
      %s341 = ssub.s32 256, 256
      %342 = vsyncadd [#allocation4], %s341
      %s343 = sshll.u32 [#allocation5], 4
      %s344 = int_to_ptr.vmem [resolvable:$true] %s343
      %349 = dma.vmem_to_hbm [thread:$0]  %s344, 256, %s7, [#allocation4], 128, 128, 8
    $region37: #{_mlp_forward_impl.1} parent=1 // pred_fallthru
      _
    // Predicated region
    $region38: #{_mlp_forward_impl.1} parent=1 // pred_check
      _
    $region39: #{_mlp_forward_impl.1} parent=1 // pred_check_branch
      %351 = sbr.rel (0) target = $region41
    $region40: #{_mlp_forward_impl.1} parent=1 // pred_region
      %352 = dma.done [#allocation4], 256
    $region41: #{_mlp_forward_impl.1} parent=1 // pred_fallthru
      _
    %353 = vsyncpa [#allocation3], 1
    %354 = vsyncpa [#allocation4], 1

</llo_original>
